<compile_context>
chip_gen: v6e
topology: v6e:2x2x1
jax: 0.10.0
libtpu: 0.0.40
codegen_flags: <defaults>
</compile_context>

<pallas_src>
import jax
import jax.numpy as jnp
from jax.experimental import pallas as pl
from jax.experimental.pallas import tpu as pltpu

LANE = 128
SUBLANE = 8
H1, H2 = 400, 300        # logical hidden sizes (from the PyTorch module)
H1_P, H2_P = 512, 384    # lane-aligned padded hidden sizes


def _round_up(n, m):
    return ((n + m - 1) // m) * m


def actor_kernel(x_ref, w1_ref, b1_ref, w2_ref, b2_ref, w3_ref, b3_ref,
                 maxac_ref, o_ref):
    x = x_ref[...]
    # Linear(obs, 400) + ReLU   (padded to 512 cols)
    h1 = jnp.dot(x, w1_ref[...], preferred_element_type=jnp.float32) + b1_ref[...]
    h1 = jnp.maximum(h1, 0.0)
    # Linear(400, 300) + ReLU   (padded to 384 cols)
    h2 = jnp.dot(h1, w2_ref[...], preferred_element_type=jnp.float32) + b2_ref[...]
    h2 = jnp.maximum(h2, 0.0)
    # Linear(300, act) + Tanh   (padded to 128 cols), then scale by max_ac
    a = jnp.dot(h2, w3_ref[...], preferred_element_type=jnp.float32) + b3_ref[...]
    o_ref[...] = (jnp.tanh(a) * maxac_ref[...]).astype(o_ref.dtype)


def init_actor_params(key, obs_dim, act_dim):
    """PyTorch-Linear-style init U[-1/sqrt(fan_in), 1/sqrt(fan_in)].
    Weights stored transposed: (in_dim, out_dim).  Logical (unpadded) shapes."""
    dims = [(obs_dim, H1), (H1, H2), (H2, act_dim)]
    params = {}
    keys = jax.random.split(key, 2 * len(dims))
    for i, (fan_in, fan_out) in enumerate(dims):
        bound = 1.0 / jnp.sqrt(jnp.float32(fan_in))
        params[f"W{i+1}"] = jax.random.uniform(
            keys[2 * i], (fan_in, fan_out), jnp.float32, -bound, bound)
        params[f"b{i+1}"] = jax.random.uniform(
            keys[2 * i + 1], (1, fan_out), jnp.float32, -bound, bound)
    return params


def pack_actor_params(params, max_ac, obs_dim, act_dim):
    """Zero-pad all operands to lane-aligned shapes (done once, outside the kernel)."""
    obs_p = _round_up(max(obs_dim, 1), LANE)
    act_p = _round_up(max(act_dim, 1), LANE)

    def pad2(a, rows, cols):
        out = jnp.zeros((rows, cols), jnp.float32)
        return out.at[:a.shape[0], :a.shape[1]].set(a.astype(jnp.float32))

    packed = {
        "W1": pad2(params["W1"], obs_p, H1_P),
        "b1": pad2(params["b1"], 1, H1_P),
        "W2": pad2(params["W2"], H1_P, H2_P),   # padded rows are 0
        "b2": pad2(params["b2"], 1, H2_P),
        "W3": pad2(params["W3"], H2_P, act_p),  # padded rows are 0
        "b3": pad2(params["b3"], 1, act_p),
        "max_ac": pad2(jnp.asarray(max_ac, jnp.float32).reshape(1, -1), 1, act_p),
    }
    return packed, obs_p, act_p


def actor_forward(x, packed, obs_dim, act_dim, *, max_batch_tile=256):
    """x: (B, obs_dim) f32.  packed: lane-padded params from pack_actor_params."""
    B = x.shape[0]
    obs_p = packed["W1"].shape[0]
    act_p = packed["W3"].shape[1]

    # Waste-aware batch tiling: split B into n nearly-equal sublane-aligned tiles.
    n_tiles = max(1, pl.cdiv(max(B, 1), max_batch_tile))
    tb = _round_up(pl.cdiv(max(B, 1), n_tiles), SUBLANE)
    b_pad = tb * n_tiles
    x_p = jnp.zeros((b_pad, obs_p), jnp.float32).at[:B, :obs_dim].set(x)

    # Weights / biases: constant block index -> DMA'd once, VMEM-resident.
    resident = lambda shape: pl.BlockSpec(shape, lambda i: (0, 0))

    out_p = pl.pallas_call(
        actor_kernel,
        out_shape=jax.ShapeDtypeStruct((b_pad, act_p), jnp.float32),
        grid=(n_tiles,),
        in_specs=[
            pl.BlockSpec((tb, obs_p), lambda i: (i, 0)),   # x streams per tile
            resident(packed["W1"].shape),
            resident(packed["b1"].shape),
            resident(packed["W2"].shape),
            resident(packed["b2"].shape),
            resident(packed["W3"].shape),
            resident(packed["b3"].shape),
            resident(packed["max_ac"].shape),
        ],
        out_specs=pl.BlockSpec((tb, act_p), lambda i: (i, 0)),
        compiler_params=pltpu.CompilerParams(
            dimension_semantics=("parallel",)),   # v7x: both TCs split the batch
    )(x_p, packed["W1"], packed["b1"], packed["W2"], packed["b2"],
      packed["W3"], packed["b3"], packed["max_ac"])

    return out_p[:B, :act_dim]


def actor_reference(x, params, max_ac):
    h = jnp.maximum(x @ params["W1"] + params["b1"], 0.0)
    h = jnp.maximum(h @ params["W2"] + params["b2"], 0.0)
    return jnp.tanh(h @ params["W3"] + params["b3"]) * jnp.asarray(
        max_ac, jnp.float32).reshape(1, -1)


if __name__ == "__main__":
    OBS, ACT = 16, 4
    key = jax.random.PRNGKey(0)
    k_x, k_p, k_x2 = jax.random.split(key, 3)

    params = init_actor_params(k_p, OBS, ACT)
    max_ac = [2.0] * ACT
    packed, obs_p, act_p = pack_actor_params(params, max_ac, OBS, ACT)

    # Small batch (single grid step, padded to one sublane group).
    x_small = jax.random.normal(k_x, (2, OBS), jnp.float32)
    out_small = jax.block_until_ready(actor_forward(x_small, packed, OBS, ACT))
    ref_small = actor_reference(x_small, params, max_ac)
    assert out_small.shape == (2, ACT)
    assert jnp.allclose(out_small, ref_small, atol=1e-4, rtol=1e-4), \
        "small-batch mismatch vs reference"

    # Larger batch exercising the batch grid (weights stay resident, x streams).
    x_big = jax.random.normal(k_x2, (300, OBS), jnp.float32)
    out_big = jax.block_until_ready(actor_forward(x_big, packed, OBS, ACT))
    ref_big = actor_reference(x_big, params, max_ac)
    assert out_big.shape == (300, ACT)
    assert jnp.allclose(out_big, ref_big, atol=1e-4, rtol=1e-4), \
        "batched mismatch vs reference"

    print("KERNEL_OK")
</pallas_src>

<mosaic_0001>
module attributes {stable_mosaic.version = 11 : i64} {
  func.func @actor_kernel(%arg0: i32, %arg1: memref<8x128xf32, #tpu.memory_space<vmem>>, %arg2: memref<128x512xf32, #tpu.memory_space<vmem>>, %arg3: memref<1x512xf32, #tpu.memory_space<vmem>>, %arg4: memref<512x384xf32, #tpu.memory_space<vmem>>, %arg5: memref<1x384xf32, #tpu.memory_space<vmem>>, %arg6: memref<384x128xf32, #tpu.memory_space<vmem>>, %arg7: memref<1x128xf32, #tpu.memory_space<vmem>>, %arg8: memref<1x128xf32, #tpu.memory_space<vmem>>, %arg9: memref<8x128xf32, #tpu.memory_space<vmem>>) attributes {dimension_semantics = [#tpu.dimension_semantics<parallel>], iteration_bounds = array<i64: 1>, scalar_prefetch = 0 : i64, scratch_operands = 0 : i64, tpu.core_type = #tpu.core_type<tc>, window_params = [{transform_indices = @transform_0, window_bounds = array<i64: 8, 128>}, {pipeline_mode = #tpu.pipeline_mode<synchronous>, transform_indices = @transform_1, window_bounds = array<i64: 128, 512>}, {pipeline_mode = #tpu.pipeline_mode<synchronous>, transform_indices = @transform_2, window_bounds = array<i64: 1, 512>}, {pipeline_mode = #tpu.pipeline_mode<synchronous>, transform_indices = @transform_3, window_bounds = array<i64: 512, 384>}, {pipeline_mode = #tpu.pipeline_mode<synchronous>, transform_indices = @transform_4, window_bounds = array<i64: 1, 384>}, {pipeline_mode = #tpu.pipeline_mode<synchronous>, transform_indices = @transform_5, window_bounds = array<i64: 384, 128>}, {pipeline_mode = #tpu.pipeline_mode<synchronous>, transform_indices = @transform_6, window_bounds = array<i64: 1, 128>}, {pipeline_mode = #tpu.pipeline_mode<synchronous>, transform_indices = @transform_7, window_bounds = array<i64: 1, 128>}, {transform_indices = @transform_8, window_bounds = array<i64: 8, 128>}]} {
    %c0 = arith.constant 0 : index
    %c0_0 = arith.constant 0 : index
    %0 = vector.load %arg1[%c0, %c0_0] : memref<8x128xf32, #tpu.memory_space<vmem>>, vector<8x128xf32>
    %c0_1 = arith.constant 0 : index
    %c0_2 = arith.constant 0 : index
    %1 = vector.load %arg2[%c0_1, %c0_2] : memref<128x512xf32, #tpu.memory_space<vmem>>, vector<128x512xf32>
    %cst = arith.constant dense<0.000000e+00> : vector<8x512xf32>
    %2 = tpu.matmul %0, %1, %cst {dimension_numbers = #tpu.dot_dimension_numbers<[1], [0], [0], [1], [0, 0, 1, 1], [], []>} : vector<8x128xf32>, vector<128x512xf32>, vector<8x512xf32> -> vector<8x512xf32>
    %c0_3 = arith.constant 0 : index
    %c0_4 = arith.constant 0 : index
    %3 = vector.load %arg3[%c0_3, %c0_4] : memref<1x512xf32, #tpu.memory_space<vmem>>, vector<1x512xf32>
    %4 = vector.broadcast %3 : vector<1x512xf32> to vector<8x512xf32>
    %5 = arith.addf %2, %4 : vector<8x512xf32>
    %cst_5 = arith.constant 0.000000e+00 : f32
    %6 = vector.broadcast %cst_5 : f32 to vector<8x512xf32>
    %7 = arith.maximumf %5, %6 : vector<8x512xf32>
    %c0_6 = arith.constant 0 : index
    %c0_7 = arith.constant 0 : index
    %8 = vector.load %arg4[%c0_6, %c0_7] : memref<512x384xf32, #tpu.memory_space<vmem>>, vector<512x384xf32>
    %cst_8 = arith.constant dense<0.000000e+00> : vector<8x384xf32>
    %9 = tpu.matmul %7, %8, %cst_8 {dimension_numbers = #tpu.dot_dimension_numbers<[1], [0], [0], [1], [0, 0, 1, 1], [], []>} : vector<8x512xf32>, vector<512x384xf32>, vector<8x384xf32> -> vector<8x384xf32>
    %c0_9 = arith.constant 0 : index
    %c0_10 = arith.constant 0 : index
    %10 = vector.load %arg5[%c0_9, %c0_10] : memref<1x384xf32, #tpu.memory_space<vmem>>, vector<1x384xf32>
    %11 = vector.broadcast %10 : vector<1x384xf32> to vector<8x384xf32>
    %12 = arith.addf %9, %11 : vector<8x384xf32>
    %cst_11 = arith.constant 0.000000e+00 : f32
    %13 = vector.broadcast %cst_11 : f32 to vector<8x384xf32>
    %14 = arith.maximumf %12, %13 : vector<8x384xf32>
    %c0_12 = arith.constant 0 : index
    %c0_13 = arith.constant 0 : index
    %15 = vector.load %arg6[%c0_12, %c0_13] : memref<384x128xf32, #tpu.memory_space<vmem>>, vector<384x128xf32>
    %cst_14 = arith.constant dense<0.000000e+00> : vector<8x128xf32>
    %16 = tpu.matmul %14, %15, %cst_14 {dimension_numbers = #tpu.dot_dimension_numbers<[1], [0], [0], [1], [0, 0, 1, 1], [], []>} : vector<8x384xf32>, vector<384x128xf32>, vector<8x128xf32> -> vector<8x128xf32>
    %c0_15 = arith.constant 0 : index
    %c0_16 = arith.constant 0 : index
    %17 = vector.load %arg7[%c0_15, %c0_16] : memref<1x128xf32, #tpu.memory_space<vmem>>, vector<1x128xf32>
    %18 = vector.broadcast %17 : vector<1x128xf32> to vector<8x128xf32>
    %19 = arith.addf %16, %18 : vector<8x128xf32>
    %20 = math.tanh %19 : vector<8x128xf32>
    %c0_17 = arith.constant 0 : index
    %c0_18 = arith.constant 0 : index
    %21 = vector.load %arg8[%c0_17, %c0_18] : memref<1x128xf32, #tpu.memory_space<vmem>>, vector<1x128xf32>
    %22 = vector.broadcast %21 : vector<1x128xf32> to vector<8x128xf32>
    %23 = arith.mulf %20, %22 : vector<8x128xf32>
    %c0_19 = arith.constant 0 : index
    %c0_20 = arith.constant 0 : index
    %24 = vector.load %arg9[%c0_19, %c0_20] : memref<8x128xf32, #tpu.memory_space<vmem>>, vector<8x128xf32>
    tpu.vector_store %arg9[%c0_19, %c0_20], %23 {strides = array<i32>} : memref<8x128xf32, #tpu.memory_space<vmem>>, vector<8x128xf32>,
    return
  }
  func.func @transform_0(%arg0: i32) -> (i32, i32) {
    %c0_i32 = arith.constant 0 : i32
    %c0_i32_0 = arith.constant 0 : i32
    return %arg0, %c0_i32 : i32, i32
  }
  func.func @transform_1(%arg0: i32) -> (i32, i32) {
    %c0_i32 = arith.constant 0 : i32
    %c0_i32_0 = arith.constant 0 : i32
    %c0_i32_1 = arith.constant 0 : i32
    return %c0_i32, %c0_i32_0 : i32, i32
  }
  func.func @transform_2(%arg0: i32) -> (i32, i32) {
    %c0_i32 = arith.constant 0 : i32
    %c0_i32_0 = arith.constant 0 : i32
    %c0_i32_1 = arith.constant 0 : i32
    return %c0_i32, %c0_i32_0 : i32, i32
  }
  func.func @transform_3(%arg0: i32) -> (i32, i32) {
    %c0_i32 = arith.constant 0 : i32
    %c0_i32_0 = arith.constant 0 : i32
    %c0_i32_1 = arith.constant 0 : i32
    return %c0_i32, %c0_i32_0 : i32, i32
  }
  func.func @transform_4(%arg0: i32) -> (i32, i32) {
    %c0_i32 = arith.constant 0 : i32
    %c0_i32_0 = arith.constant 0 : i32
    %c0_i32_1 = arith.constant 0 : i32
    return %c0_i32, %c0_i32_0 : i32, i32
  }
  func.func @transform_5(%arg0: i32) -> (i32, i32) {
    %c0_i32 = arith.constant 0 : i32
    %c0_i32_0 = arith.constant 0 : i32
    %c0_i32_1 = arith.constant 0 : i32
    return %c0_i32, %c0_i32_0 : i32, i32
  }
  func.func @transform_6(%arg0: i32) -> (i32, i32) {
    %c0_i32 = arith.constant 0 : i32
    %c0_i32_0 = arith.constant 0 : i32
    %c0_i32_1 = arith.constant 0 : i32
    return %c0_i32, %c0_i32_0 : i32, i32
  }
  func.func @transform_7(%arg0: i32) -> (i32, i32) {
    %c0_i32 = arith.constant 0 : i32
    %c0_i32_0 = arith.constant 0 : i32
    %c0_i32_1 = arith.constant 0 : i32
    return %c0_i32, %c0_i32_0 : i32, i32
  }
  func.func @transform_8(%arg0: i32) -> (i32, i32) {
    %c0_i32 = arith.constant 0 : i32
    %c0_i32_0 = arith.constant 0 : i32
    return %arg0, %c0_i32 : i32, i32
  }
}

</mosaic_0001>

<llo_original>
// kernel: tpu_custom_call.1
$region0: #{tpu_custom_call.1}
  #allocation0 [shape = 'u32[]', space=smem, size = 0x4, offset = 0x4, fixed_abs, tag = 'smem constant byte address 0x4 - core index']
  #allocation1 [shape = 'u32[144,128]{1,0:T(1,128)}', space=vmem, size = 0x12000, scoped, tag = 'internal scratch']
  %s0 = inlined_call_operand.hbm [shape: f32[8,128], index: 0, kind: input, shape index: {}]
  %s1 = inlined_call_operand.hbm [shape: f32[128,512], index: 1, kind: input, shape index: {}]
  %s2 = inlined_call_operand.hbm [shape: f32[1,512], index: 2, kind: input, shape index: {}]
  %s3 = inlined_call_operand.hbm [shape: f32[512,384], index: 3, kind: input, shape index: {}]
  %s4 = inlined_call_operand.vmem [shape: f32[1,384], index: 4, kind: input, shape index: {}]
  %s5 = inlined_call_operand.hbm [shape: f32[384,128], index: 5, kind: input, shape index: {}]
  %s6 = inlined_call_operand.vmem [shape: f32[1,128], index: 6, kind: input, shape index: {}]
  %s7 = inlined_call_operand.vmem [shape: f32[1,128], index: 7, kind: input, shape index: {}]
  %s8 = inlined_call_operand.hbm [shape: f32[8,128], index: 8, kind: output, shape index: {}]
  %s9 = sld [smem:[#allocation0]]
  $region62: #{tpu_custom_call.1} parent=0
    _
  %s11 = ssub.s32 1, %s9
  %s12 = scalar_select 0, %s11, %s9
  $region1: #{tpu_custom_call.1} parent=0
    #allocation2 [shape = 'u8[4096]{0}', space=vmem, size = 0x1000, scoped, tag = 'input window, operand 0, single buffered']
    #allocation3 [shape = 's32[1]{0}', space=sflag, size = 0x4, scoped, tag = 'scoped memory for tpu_custom_call.1']
    #allocation4 [shape = 's32[1]{0}', space=sflag, size = 0x4, scoped, tag = 'scoped memory for tpu_custom_call.1']
    #allocation5 [shape = 'u8[262144]{0}', space=vmem, size = 0x40000, scoped, tag = 'input window, operand 1, single buffered']
    #allocation6 [shape = 's32[1]{0}', space=sflag, size = 0x4, scoped, tag = 'scoped memory for tpu_custom_call.1']
    #allocation7 [shape = 'u8[2048]{0}', space=vmem, size = 0x800, scoped, tag = 'input window, operand 2, single buffered']
    #allocation8 [shape = 'u8[786432]{0}', space=vmem, size = 0xc0000, scoped, tag = 'input window, operand 3, single buffered']
    #allocation9 [shape = 's32[1]{0}', space=sflag, size = 0x4, scoped, tag = 'scoped memory for tpu_custom_call.1']
    #allocation10 [shape = 'u8[196608]{0}', space=vmem, size = 0x30000, scoped, tag = 'input window, operand 5, single buffered']
    #allocation11 [shape = 'u8[4096]{0}', space=vmem, size = 0x1000, scoped, tag = 'output window, operand 0, single buffered']
    %13 = vsyncpa [#allocation3], 0
    %14 = vsyncpa [#allocation6], 0
    %15 = vsyncpa [#allocation9], 0
    %16 = vsyncpa [#allocation4], 0
    // Predicated region
    $region2: #{tpu_custom_call.1} parent=1 // pred_check
      _
    $region3: #{tpu_custom_call.1} parent=1 // pred_check_branch
      %18 = sbr.rel (0) target = $region5
    $region4: #{tpu_custom_call.1} parent=1 // pred_region
      %s20 = ssub.s32 128, 128
      %21 = vsyncadd [#allocation3], %s20
      %s23 = sshll.u32 [#allocation2], 4
      %s24 = int_to_ptr.vmem [resolvable:$true] %s23
      %26 = dma.hbm_to_vmem [thread:$0]  %s0, 128, %s24, [#allocation3]
    $region5: #{tpu_custom_call.1} parent=1 // pred_fallthru
      _
    // Predicated region
    $region6: #{tpu_custom_call.1} parent=1 // pred_check
      _
    $region7: #{tpu_custom_call.1} parent=1 // pred_check_branch
      %28 = sbr.rel (0) target = $region9
    $region8: #{tpu_custom_call.1} parent=1 // pred_region
      %s30 = ssub.s32 8192, 8192
      %31 = vsyncadd [#allocation6], %s30
      %s32 = sshll.u32 [#allocation5], 4
      %s33 = int_to_ptr.vmem [resolvable:$true] %s32
      %38 = dma.hbm_to_vmem [thread:$0]  %s1, 8192, %s33, [#allocation6], 512, 512, 32
    $region9: #{tpu_custom_call.1} parent=1 // pred_fallthru
      _
    // Predicated region
    $region10: #{tpu_custom_call.1} parent=1 // pred_check
      _
    $region11: #{tpu_custom_call.1} parent=1 // pred_check_branch
      %40 = sbr.rel (0) target = $region13
    $region12: #{tpu_custom_call.1} parent=1 // pred_region
      %s42 = ssub.s32 64, 64
      %43 = vsyncadd [#allocation6], %s42
      %s45 = sshll.u32 [#allocation7], 4
      %s46 = int_to_ptr.vmem [resolvable:$true] %s45
      %48 = dma.hbm_to_vmem [thread:$0]  %s2, 64, %s46, [#allocation6]
    $region13: #{tpu_custom_call.1} parent=1 // pred_fallthru
      _
    // Predicated region
    $region14: #{tpu_custom_call.1} parent=1 // pred_check
      _
    $region15: #{tpu_custom_call.1} parent=1 // pred_check_branch
      %50 = sbr.rel (0) target = $region17
    $region16: #{tpu_custom_call.1} parent=1 // pred_region
      %s52 = ssub.s32 24576, 24576
      %53 = vsyncadd [#allocation9], %s52
      %s54 = sshll.u32 [#allocation8], 4
      %s55 = int_to_ptr.vmem [resolvable:$true] %s54
      %60 = dma.hbm_to_vmem [thread:$0]  %s3, 24576, %s55, [#allocation9], 384, 384, 24
    $region17: #{tpu_custom_call.1} parent=1 // pred_fallthru
      _
    // Predicated region
    $region18: #{tpu_custom_call.1} parent=1 // pred_check
      _
    $region19: #{tpu_custom_call.1} parent=1 // pred_check_branch
      %62 = sbr.rel (0) target = $region21
    $region20: #{tpu_custom_call.1} parent=1 // pred_region
      _
    $region21: #{tpu_custom_call.1} parent=1 // pred_fallthru
      _
    // Predicated region
    $region22: #{tpu_custom_call.1} parent=1 // pred_check
      _
    $region23: #{tpu_custom_call.1} parent=1 // pred_check_branch
      %64 = sbr.rel (0) target = $region25
    $region24: #{tpu_custom_call.1} parent=1 // pred_region
      %s66 = ssub.s32 6144, 6144
      %67 = vsyncadd [#allocation9], %s66
      %s68 = sshll.u32 [#allocation10], 4
      %s69 = int_to_ptr.vmem [resolvable:$true] %s68
      %74 = dma.hbm_to_vmem [thread:$0]  %s5, 6144, %s69, [#allocation9], 128, 128, 8
    $region25: #{tpu_custom_call.1} parent=1 // pred_fallthru
      _
    // Predicated region
    $region26: #{tpu_custom_call.1} parent=1 // pred_check
      _
    $region27: #{tpu_custom_call.1} parent=1 // pred_check_branch
      %76 = sbr.rel (0) target = $region29
    $region28: #{tpu_custom_call.1} parent=1 // pred_region
      _
    $region29: #{tpu_custom_call.1} parent=1 // pred_fallthru
      _
    // Predicated region
    $region30: #{tpu_custom_call.1} parent=1 // pred_check
      _
    $region31: #{tpu_custom_call.1} parent=1 // pred_check_branch
      %78 = sbr.rel (0) target = $region33
    $region32: #{tpu_custom_call.1} parent=1 // pred_region
      _
    $region33: #{tpu_custom_call.1} parent=1 // pred_fallthru
      _
    // Predicated region
    $region34: #{tpu_custom_call.1} parent=1 // pred_check
      _
    $region35: #{tpu_custom_call.1} parent=1 // pred_check_branch
      %80 = sbr.rel (0) target = $region37
    $region36: #{tpu_custom_call.1} parent=1 // pred_region
      %81 = dma.done [#allocation3], 128
    $region37: #{tpu_custom_call.1} parent=1 // pred_fallthru
      _
    // Predicated region
    $region38: #{tpu_custom_call.1} parent=1 // pred_check
      _
    $region39: #{tpu_custom_call.1} parent=1 // pred_check_branch
      %83 = sbr.rel (0) target = $region41
    $region40: #{tpu_custom_call.1} parent=1 // pred_region
      %84 = dma.done [#allocation6], 8192
    $region41: #{tpu_custom_call.1} parent=1 // pred_fallthru
      _
    // Predicated region
    $region42: #{tpu_custom_call.1} parent=1 // pred_check
      _
    $region43: #{tpu_custom_call.1} parent=1 // pred_check_branch
      %86 = sbr.rel (0) target = $region45
    $region44: #{tpu_custom_call.1} parent=1 // pred_region
      %87 = dma.done [#allocation6], 64
    $region45: #{tpu_custom_call.1} parent=1 // pred_fallthru
      _
    // Predicated region
    $region46: #{tpu_custom_call.1} parent=1 // pred_check
      _
    $region47: #{tpu_custom_call.1} parent=1 // pred_check_branch
      %89 = sbr.rel (0) target = $region49
    $region48: #{tpu_custom_call.1} parent=1 // pred_region
      %90 = dma.done [#allocation9], 24576
    $region49: #{tpu_custom_call.1} parent=1 // pred_fallthru
      _
    // Predicated region
    $region50: #{tpu_custom_call.1} parent=1 // pred_check
      _
    $region51: #{tpu_custom_call.1} parent=1 // pred_check_branch
      %92 = sbr.rel (0) target = $region53
    $region52: #{tpu_custom_call.1} parent=1 // pred_region
      %93 = dma.done [#allocation9], 6144
    $region53: #{tpu_custom_call.1} parent=1 // pred_fallthru
      _
    %v94 = vld [vmem:[#allocation2] sm:$0xff]
    %v95 = vld [vmem:[#allocation5] sm:$0xff]
    %v96 = vld [vmem:[#allocation5 + $0x8] sm:$0xff]
    %v97 = vld [vmem:[#allocation5 + $0x10] sm:$0xff]
    %v98 = vld [vmem:[#allocation5 + $0x18] sm:$0xff]
    %v99 = vld [vmem:[#allocation5 + $0x20] sm:$0xff]
    %v100 = vld [vmem:[#allocation5 + $0x28] sm:$0xff]
    %v101 = vld [vmem:[#allocation5 + $0x30] sm:$0xff]
    %v102 = vld [vmem:[#allocation5 + $0x38] sm:$0xff]
    %v103 = vld [vmem:[#allocation5 + $0x40] sm:$0xff]
    %v104 = vld [vmem:[#allocation5 + $0x48] sm:$0xff]
    %v105 = vld [vmem:[#allocation5 + $0x50] sm:$0xff]
    %v106 = vld [vmem:[#allocation5 + $0x58] sm:$0xff]
    %v107 = vld [vmem:[#allocation5 + $0x60] sm:$0xff]
    %v108 = vld [vmem:[#allocation5 + $0x68] sm:$0xff]
    %v109 = vld [vmem:[#allocation5 + $0x70] sm:$0xff]
    %v110 = vld [vmem:[#allocation5 + $0x78] sm:$0xff]
    %v111 = vld [vmem:[#allocation5 + $0x80] sm:$0xff]
    %v112 = vld [vmem:[#allocation5 + $0x88] sm:$0xff]
    %v113 = vld [vmem:[#allocation5 + $0x90] sm:$0xff]
    %v114 = vld [vmem:[#allocation5 + $0x98] sm:$0xff]
    %v115 = vld [vmem:[#allocation5 + $0xa0] sm:$0xff]
    %v116 = vld [vmem:[#allocation5 + $0xa8] sm:$0xff]
    %v117 = vld [vmem:[#allocation5 + $0xb0] sm:$0xff]
    %v118 = vld [vmem:[#allocation5 + $0xb8] sm:$0xff]
    %v119 = vld [vmem:[#allocation5 + $0xc0] sm:$0xff]
    %v120 = vld [vmem:[#allocation5 + $0xc8] sm:$0xff]
    %v121 = vld [vmem:[#allocation5 + $0xd0] sm:$0xff]
    %v122 = vld [vmem:[#allocation5 + $0xd8] sm:$0xff]
    %v123 = vld [vmem:[#allocation5 + $0xe0] sm:$0xff]
    %v124 = vld [vmem:[#allocation5 + $0xe8] sm:$0xff]
    %v125 = vld [vmem:[#allocation5 + $0xf0] sm:$0xff]
    %v126 = vld [vmem:[#allocation5 + $0xf8] sm:$0xff]
    %v127 = vld [vmem:[#allocation5 + $0x100] sm:$0xff]
    %v128 = vld [vmem:[#allocation5 + $0x108] sm:$0xff]
    %v129 = vld [vmem:[#allocation5 + $0x110] sm:$0xff]
    %v130 = vld [vmem:[#allocation5 + $0x118] sm:$0xff]
    %v131 = vld [vmem:[#allocation5 + $0x120] sm:$0xff]
    %v132 = vld [vmem:[#allocation5 + $0x128] sm:$0xff]
    %v133 = vld [vmem:[#allocation5 + $0x130] sm:$0xff]
    %v134 = vld [vmem:[#allocation5 + $0x138] sm:$0xff]
    %v135 = vld [vmem:[#allocation5 + $0x140] sm:$0xff]
    %v136 = vld [vmem:[#allocation5 + $0x148] sm:$0xff]
    %v137 = vld [vmem:[#allocation5 + $0x150] sm:$0xff]
    %v138 = vld [vmem:[#allocation5 + $0x158] sm:$0xff]
    %v139 = vld [vmem:[#allocation5 + $0x160] sm:$0xff]
    %v140 = vld [vmem:[#allocation5 + $0x168] sm:$0xff]
    %v141 = vld [vmem:[#allocation5 + $0x170] sm:$0xff]
    %v142 = vld [vmem:[#allocation5 + $0x178] sm:$0xff]
    %v143 = vld [vmem:[#allocation5 + $0x180] sm:$0xff]
    %v144 = vld [vmem:[#allocation5 + $0x188] sm:$0xff]
    %v145 = vld [vmem:[#allocation5 + $0x190] sm:$0xff]
    %v146 = vld [vmem:[#allocation5 + $0x198] sm:$0xff]
    %v147 = vld [vmem:[#allocation5 + $0x1a0] sm:$0xff]
    %v148 = vld [vmem:[#allocation5 + $0x1a8] sm:$0xff]
    %v149 = vld [vmem:[#allocation5 + $0x1b0] sm:$0xff]
    %v150 = vld [vmem:[#allocation5 + $0x1b8] sm:$0xff]
    %v151 = vld [vmem:[#allocation5 + $0x1c0] sm:$0xff]
    %v152 = vld [vmem:[#allocation5 + $0x1c8] sm:$0xff]
    %v153 = vld [vmem:[#allocation5 + $0x1d0] sm:$0xff]
    %v154 = vld [vmem:[#allocation5 + $0x1d8] sm:$0xff]
    %v155 = vld [vmem:[#allocation5 + $0x1e0] sm:$0xff]
    %v156 = vld [vmem:[#allocation5 + $0x1e8] sm:$0xff]
    %v157 = vld [vmem:[#allocation5 + $0x1f0] sm:$0xff]
    %v158 = vld [vmem:[#allocation5 + $0x1f8] sm:$0xff]
    %v159 = vld [vmem:[#allocation7] sm:$0xf]
    %v161 = vlaneseq
    %v162 = vshrl.u32 %v161, 7
    %v163 = vsub.s32 0, %v162
    %v164 = vrot.slane %v159, %v163
    %v165 = vlaneseq
    %v166 = vshrl.u32 %v165, 7
    %v167 = vsub.s32 1, %v166
    %v168 = vrot.slane %v159, %v167
    %v169 = vlaneseq
    %v170 = vshrl.u32 %v169, 7
    %v171 = vsub.s32 2, %v170
    %v172 = vrot.slane %v159, %v171
    %v173 = vlaneseq
    %v174 = vshrl.u32 %v173, 7
    %v175 = vsub.s32 3, %v174
    %v176 = vrot.slane %v159, %v175
    %181 = vmatprep.subr.mxu0 %v156
    %182 = vmatpush1.msra.mxu0 %v155
    %183 = vmatprep.subr.mxu0 %v152
    %184 = vmatpush1.msra.mxu0 %v151
    %185 = vmatprep.subr.mxu0 %v148
    %186 = vmatpush1.msra.mxu0 %v147
    %187 = vmatprep.subr.mxu0 %v144
    %188 = vmatpush1.msra.mxu0 %v143
    %189 = vmatprep.subr.mxu0 %v140
    %190 = vmatpush1.msra.mxu0 %v139
    %191 = vmatprep.subr.mxu0 %v136
    %192 = vmatpush1.msra.mxu0 %v135
    %193 = vmatprep.subr.mxu0 %v132
    %194 = vmatpush1.msra.mxu0 %v131
    %195 = vmatprep.subr.mxu0 %v128
    %196 = vmatpush1.msra.mxu0 %v127
    %197 = vmatprep.subr.mxu0 %v124
    %198 = vmatpush1.msra.mxu0 %v123
    %199 = vmatprep.subr.mxu0 %v120
    %200 = vmatpush1.msra.mxu0 %v119
    %201 = vmatprep.subr.mxu0 %v116
    %202 = vmatpush1.msra.mxu0 %v115
    %203 = vmatprep.subr.mxu0 %v112
    %204 = vmatpush1.msra.mxu0 %v111
    %205 = vmatprep.subr.mxu0 %v108
    %206 = vmatpush1.msra.mxu0 %v107
    %207 = vmatprep.subr.mxu0 %v104
    %208 = vmatpush1.msra.mxu0 %v103
    %209 = vmatprep.subr.mxu0 %v100
    %210 = vmatpush1.msra.mxu0 %v99
    %211 = vmatprep.subr.mxu0 %v96
    %212 = vmatpush1.msra.mxu0 %v95
    %213 = vmatprep.subr.mxu0 0.0
    %214 = vmatpush2.msra.mxu0 0.0
    %215 = vmatprep.subr.mxu0 0.0
    %216 = vmatpush2.msra.mxu0 0.0
    %217 = vmatprep.subr.mxu0 0.0
    %218 = vmatpush2.msra.mxu0 0.0
    %219 = vmatprep.subr.mxu0 0.0
    %220 = vmatpush2.msra.mxu0 0.0
    %221 = vmatprep.subr.mxu0 0.0
    %222 = vmatpush2.msra.mxu0 0.0
    %223 = vmatprep.subr.mxu0 0.0
    %224 = vmatpush2.msra.mxu0 0.0
    %225 = vmatprep.subr.mxu0 0.0
    %226 = vmatpush2.msra.mxu0 0.0
    %227 = vmatprep.subr.mxu0 0.0
    %228 = vmatpush2.msra.mxu0 0.0
    %229 = vmatprep.subr.mxu0 0.0
    %230 = vmatpush2.msra.mxu0 0.0
    %231 = vmatprep.subr.mxu0 0.0
    %232 = vmatpush2.msra.mxu0 0.0
    %233 = vmatprep.subr.mxu0 0.0
    %234 = vmatpush2.msra.mxu0 0.0
    %235 = vmatprep.subr.mxu0 0.0
    %236 = vmatpush2.msra.mxu0 0.0
    %237 = vmatprep.subr.mxu0 0.0
    %238 = vmatpush2.msra.mxu0 0.0
    %239 = vmatprep.subr.mxu0 0.0
    %240 = vmatpush2.msra.mxu0 0.0
    %241 = vmatprep.subr.mxu0 0.0
    %242 = vmatpush2.msra.mxu0 0.0
    %243 = vmatprep.subr.mxu0 0.0
    %244 = vmatpush2.msra.mxu0 0.0
    %245 = vmatprep.mubr.f32.mxu0 0.0
    %246 = vmatmul.mubr.f32.gmra.mxu0 %v94
    %v247 = vpop.f32.mrf.mxu0
    %v248 = vadd.f32 %v164, %v247
    %v249 = vpop.f32.mrf.mxu0
    %v250 = vadd.f32 %v168, %v249
    %251 = vdwg.mxu0
    %252 = vmatprep.subr.mxu0 %v158
    %253 = vmatpush1.msra.mxu0 %v157
    %254 = vmatprep.subr.mxu0 %v154
    %255 = vmatpush1.msra.mxu0 %v153
    %256 = vmatprep.subr.mxu0 %v150
    %257 = vmatpush1.msra.mxu0 %v149
    %258 = vmatprep.subr.mxu0 %v146
    %259 = vmatpush1.msra.mxu0 %v145
    %260 = vmatprep.subr.mxu0 %v142
    %261 = vmatpush1.msra.mxu0 %v141
    %262 = vmatprep.subr.mxu0 %v138
    %263 = vmatpush1.msra.mxu0 %v137
    %264 = vmatprep.subr.mxu0 %v134
    %265 = vmatpush1.msra.mxu0 %v133
    %266 = vmatprep.subr.mxu0 %v130
    %267 = vmatpush1.msra.mxu0 %v129
    %268 = vmatprep.subr.mxu0 %v126
    %269 = vmatpush1.msra.mxu0 %v125
    %270 = vmatprep.subr.mxu0 %v122
    %271 = vmatpush1.msra.mxu0 %v121
    %272 = vmatprep.subr.mxu0 %v118
    %273 = vmatpush1.msra.mxu0 %v117
    %274 = vmatprep.subr.mxu0 %v114
    %275 = vmatpush1.msra.mxu0 %v113
    %276 = vmatprep.subr.mxu0 %v110
    %277 = vmatpush1.msra.mxu0 %v109
    %278 = vmatprep.subr.mxu0 %v106
    %279 = vmatpush1.msra.mxu0 %v105
    %280 = vmatprep.subr.mxu0 %v102
    %281 = vmatpush1.msra.mxu0 %v101
    %282 = vmatprep.subr.mxu0 %v98
    %283 = vmatpush1.msra.mxu0 %v97
    %284 = vmatprep.subr.mxu0 0.0
    %285 = vmatpush2.msra.mxu0 0.0
    %286 = vmatprep.subr.mxu0 0.0
    %287 = vmatpush2.msra.mxu0 0.0
    %288 = vmatprep.subr.mxu0 0.0
    %289 = vmatpush2.msra.mxu0 0.0
    %290 = vmatprep.subr.mxu0 0.0
    %291 = vmatpush2.msra.mxu0 0.0
    %292 = vmatprep.subr.mxu0 0.0
    %293 = vmatpush2.msra.mxu0 0.0
    %294 = vmatprep.subr.mxu0 0.0
    %295 = vmatpush2.msra.mxu0 0.0
    %296 = vmatprep.subr.mxu0 0.0
    %297 = vmatpush2.msra.mxu0 0.0
    %298 = vmatprep.subr.mxu0 0.0
    %299 = vmatpush2.msra.mxu0 0.0
    %300 = vmatprep.subr.mxu0 0.0
    %301 = vmatpush2.msra.mxu0 0.0
    %302 = vmatprep.subr.mxu0 0.0
    %303 = vmatpush2.msra.mxu0 0.0
    %304 = vmatprep.subr.mxu0 0.0
    %305 = vmatpush2.msra.mxu0 0.0
    %306 = vmatprep.subr.mxu0 0.0
    %307 = vmatpush2.msra.mxu0 0.0
    %308 = vmatprep.subr.mxu0 0.0
    %309 = vmatpush2.msra.mxu0 0.0
    %310 = vmatprep.subr.mxu0 0.0
    %311 = vmatpush2.msra.mxu0 0.0
    %312 = vmatprep.subr.mxu0 0.0
    %313 = vmatpush2.msra.mxu0 0.0
    %314 = vmatprep.subr.mxu0 0.0
    %315 = vmatpush2.msra.mxu0 0.0
    %316 = vmatprep.mubr.f32.mxu0 0.0
    %317 = vmatmul.mubr.f32.gmra.mxu0 %v94
    %v318 = vpop.f32.mrf.mxu0
    %v319 = vadd.f32 %v172, %v318
    %v320 = vpop.f32.mrf.mxu0
    %v321 = vadd.f32 %v176, %v320
    %322 = vdwg.mxu0
    %v323 = vmax.f32 %v248, 0.0
    %v324 = vmax.f32 %v250, 0.0
    %v325 = vmax.f32 %v319, 0.0
    %v326 = vmax.f32 %v321, 0.0
    %v327 = vld [vmem:[#allocation8] sm:$0xff]
    %v328 = vld [vmem:[#allocation8 + $0x8] sm:$0xff]
    %v329 = vld [vmem:[#allocation8 + $0x10] sm:$0xff]
    %v330 = vld [vmem:[#allocation8 + $0x18] sm:$0xff]
    %v331 = vld [vmem:[#allocation8 + $0x20] sm:$0xff]
    %v332 = vld [vmem:[#allocation8 + $0x28] sm:$0xff]
    %v333 = vld [vmem:[#allocation8 + $0x30] sm:$0xff]
    %v334 = vld [vmem:[#allocation8 + $0x38] sm:$0xff]
    %v335 = vld [vmem:[#allocation8 + $0x40] sm:$0xff]
    %v336 = vld [vmem:[#allocation8 + $0x48] sm:$0xff]
    %v337 = vld [vmem:[#allocation8 + $0x50] sm:$0xff]
    %v338 = vld [vmem:[#allocation8 + $0x58] sm:$0xff]
    %v339 = vld [vmem:[#allocation8 + $0x60] sm:$0xff]
    %v340 = vld [vmem:[#allocation8 + $0x68] sm:$0xff]
    %v341 = vld [vmem:[#allocation8 + $0x70] sm:$0xff]
    %v342 = vld [vmem:[#allocation8 + $0x78] sm:$0xff]
    %v343 = vld [vmem:[#allocation8 + $0x80] sm:$0xff]
    %v344 = vld [vmem:[#allocation8 + $0x88] sm:$0xff]
    %v345 = vld [vmem:[#allocation8 + $0x90] sm:$0xff]
    %v346 = vld [vmem:[#allocation8 + $0x98] sm:$0xff]
    %v347 = vld [vmem:[#allocation8 + $0xa0] sm:$0xff]
    %v348 = vld [vmem:[#allocation8 + $0xa8] sm:$0xff]
    %v349 = vld [vmem:[#allocation8 + $0xb0] sm:$0xff]
    %v350 = vld [vmem:[#allocation8 + $0xb8] sm:$0xff]
    %v351 = vld [vmem:[#allocation8 + $0xc0] sm:$0xff]
    %v352 = vld [vmem:[#allocation8 + $0xc8] sm:$0xff]
    %v353 = vld [vmem:[#allocation8 + $0xd0] sm:$0xff]
    %v354 = vld [vmem:[#allocation8 + $0xd8] sm:$0xff]
    %v355 = vld [vmem:[#allocation8 + $0xe0] sm:$0xff]
    %v356 = vld [vmem:[#allocation8 + $0xe8] sm:$0xff]
    %v357 = vld [vmem:[#allocation8 + $0xf0] sm:$0xff]
    %v358 = vld [vmem:[#allocation8 + $0xf8] sm:$0xff]
    %v359 = vld [vmem:[#allocation8 + $0x100] sm:$0xff]
    %v360 = vld [vmem:[#allocation8 + $0x108] sm:$0xff]
    %v361 = vld [vmem:[#allocation8 + $0x110] sm:$0xff]
    %v362 = vld [vmem:[#allocation8 + $0x118] sm:$0xff]
    %v363 = vld [vmem:[#allocation8 + $0x120] sm:$0xff]
    %v364 = vld [vmem:[#allocation8 + $0x128] sm:$0xff]
    %v365 = vld [vmem:[#allocation8 + $0x130] sm:$0xff]
    %v366 = vld [vmem:[#allocation8 + $0x138] sm:$0xff]
    %v367 = vld [vmem:[#allocation8 + $0x140] sm:$0xff]
    %v368 = vld [vmem:[#allocation8 + $0x148] sm:$0xff]
    %v369 = vld [vmem:[#allocation8 + $0x150] sm:$0xff]
    %v370 = vld [vmem:[#allocation8 + $0x158] sm:$0xff]
    %v371 = vld [vmem:[#allocation8 + $0x160] sm:$0xff]
    %v372 = vld [vmem:[#allocation8 + $0x168] sm:$0xff]
    %v373 = vld [vmem:[#allocation8 + $0x170] sm:$0xff]
    %v374 = vld [vmem:[#allocation8 + $0x178] sm:$0xff]
    %v375 = vld [vmem:[#allocation8 + $0x180] sm:$0xff]
    %v376 = vld [vmem:[#allocation8 + $0x188] sm:$0xff]
    %v377 = vld [vmem:[#allocation8 + $0x190] sm:$0xff]
    %v378 = vld [vmem:[#allocation8 + $0x198] sm:$0xff]
    %v379 = vld [vmem:[#allocation8 + $0x1a0] sm:$0xff]
    %v380 = vld [vmem:[#allocation8 + $0x1a8] sm:$0xff]
    %v381 = vld [vmem:[#allocation8 + $0x1b0] sm:$0xff]
    %v382 = vld [vmem:[#allocation8 + $0x1b8] sm:$0xff]
    %v383 = vld [vmem:[#allocation8 + $0x1c0] sm:$0xff]
    %v384 = vld [vmem:[#allocation8 + $0x1c8] sm:$0xff]
    %v385 = vld [vmem:[#allocation8 + $0x1d0] sm:$0xff]
    %v386 = vld [vmem:[#allocation8 + $0x1d8] sm:$0xff]
    %v387 = vld [vmem:[#allocation8 + $0x1e0] sm:$0xff]
    %v388 = vld [vmem:[#allocation8 + $0x1e8] sm:$0xff]
    %v389 = vld [vmem:[#allocation8 + $0x1f0] sm:$0xff]
    %v390 = vld [vmem:[#allocation8 + $0x1f8] sm:$0xff]
    %v391 = vld [vmem:[#allocation8 + $0x200] sm:$0xff]
    %v392 = vld [vmem:[#allocation8 + $0x208] sm:$0xff]
    %v393 = vld [vmem:[#allocation8 + $0x210] sm:$0xff]
    %v394 = vld [vmem:[#allocation8 + $0x218] sm:$0xff]
    %v395 = vld [vmem:[#allocation8 + $0x220] sm:$0xff]
    %v396 = vld [vmem:[#allocation8 + $0x228] sm:$0xff]
    %v397 = vld [vmem:[#allocation8 + $0x230] sm:$0xff]
    %v398 = vld [vmem:[#allocation8 + $0x238] sm:$0xff]
    %v399 = vld [vmem:[#allocation8 + $0x240] sm:$0xff]
    %v400 = vld [vmem:[#allocation8 + $0x248] sm:$0xff]
    %v401 = vld [vmem:[#allocation8 + $0x250] sm:$0xff]
    %v402 = vld [vmem:[#allocation8 + $0x258] sm:$0xff]
    %v403 = vld [vmem:[#allocation8 + $0x260] sm:$0xff]
    %v404 = vld [vmem:[#allocation8 + $0x268] sm:$0xff]
    %v405 = vld [vmem:[#allocation8 + $0x270] sm:$0xff]
    %v406 = vld [vmem:[#allocation8 + $0x278] sm:$0xff]
    %v407 = vld [vmem:[#allocation8 + $0x280] sm:$0xff]
    %v408 = vld [vmem:[#allocation8 + $0x288] sm:$0xff]
    %v409 = vld [vmem:[#allocation8 + $0x290] sm:$0xff]
    %v410 = vld [vmem:[#allocation8 + $0x298] sm:$0xff]
    %v411 = vld [vmem:[#allocation8 + $0x2a0] sm:$0xff]
    %v412 = vld [vmem:[#allocation8 + $0x2a8] sm:$0xff]
    %v413 = vld [vmem:[#allocation8 + $0x2b0] sm:$0xff]
    %v414 = vld [vmem:[#allocation8 + $0x2b8] sm:$0xff]
    %v415 = vld [vmem:[#allocation8 + $0x2c0] sm:$0xff]
    %v416 = vld [vmem:[#allocation8 + $0x2c8] sm:$0xff]
    %v417 = vld [vmem:[#allocation8 + $0x2d0] sm:$0xff]
    %v418 = vld [vmem:[#allocation8 + $0x2d8] sm:$0xff]
    %v419 = vld [vmem:[#allocation8 + $0x2e0] sm:$0xff]
    %v420 = vld [vmem:[#allocation8 + $0x2e8] sm:$0xff]
    %v421 = vld [vmem:[#allocation8 + $0x2f0] sm:$0xff]
    %v422 = vld [vmem:[#allocation8 + $0x2f8] sm:$0xff]
    %v423 = vld [vmem:[#allocation8 + $0x300] sm:$0xff]
    %v424 = vld [vmem:[#allocation8 + $0x308] sm:$0xff]
    %v425 = vld [vmem:[#allocation8 + $0x310] sm:$0xff]
    %v426 = vld [vmem:[#allocation8 + $0x318] sm:$0xff]
    %v427 = vld [vmem:[#allocation8 + $0x320] sm:$0xff]
    %v428 = vld [vmem:[#allocation8 + $0x328] sm:$0xff]
    %v429 = vld [vmem:[#allocation8 + $0x330] sm:$0xff]
    %v430 = vld [vmem:[#allocation8 + $0x338] sm:$0xff]
    %v431 = vld [vmem:[#allocation8 + $0x340] sm:$0xff]
    %v432 = vld [vmem:[#allocation8 + $0x348] sm:$0xff]
    %v433 = vld [vmem:[#allocation8 + $0x350] sm:$0xff]
    %v434 = vld [vmem:[#allocation8 + $0x358] sm:$0xff]
    %v435 = vld [vmem:[#allocation8 + $0x360] sm:$0xff]
    %v436 = vld [vmem:[#allocation8 + $0x368] sm:$0xff]
    %v437 = vld [vmem:[#allocation8 + $0x370] sm:$0xff]
    %v438 = vld [vmem:[#allocation8 + $0x378] sm:$0xff]
    %v439 = vld [vmem:[#allocation8 + $0x380] sm:$0xff]
    %v440 = vld [vmem:[#allocation8 + $0x388] sm:$0xff]
    %v441 = vld [vmem:[#allocation8 + $0x390] sm:$0xff]
    %v442 = vld [vmem:[#allocation8 + $0x398] sm:$0xff]
    %v443 = vld [vmem:[#allocation8 + $0x3a0] sm:$0xff]
    %v444 = vld [vmem:[#allocation8 + $0x3a8] sm:$0xff]
    %v445 = vld [vmem:[#allocation8 + $0x3b0] sm:$0xff]
    %v446 = vld [vmem:[#allocation8 + $0x3b8] sm:$0xff]
    %v447 = vld [vmem:[#allocation8 + $0x3c0] sm:$0xff]
    %v448 = vld [vmem:[#allocation8 + $0x3c8] sm:$0xff]
    %v449 = vld [vmem:[#allocation8 + $0x3d0] sm:$0xff]
    %v450 = vld [vmem:[#allocation8 + $0x3d8] sm:$0xff]
    %v451 = vld [vmem:[#allocation8 + $0x3e0] sm:$0xff]
    %v452 = vld [vmem:[#allocation8 + $0x3e8] sm:$0xff]
    %v453 = vld [vmem:[#allocation8 + $0x3f0] sm:$0xff]
    %v454 = vld [vmem:[#allocation8 + $0x3f8] sm:$0xff]
    %v455 = vld [vmem:[#allocation8 + $0x400] sm:$0xff]
    %v456 = vld [vmem:[#allocation8 + $0x408] sm:$0xff]
    %v457 = vld [vmem:[#allocation8 + $0x410] sm:$0xff]
    %v458 = vld [vmem:[#allocation8 + $0x418] sm:$0xff]
    %v459 = vld [vmem:[#allocation8 + $0x420] sm:$0xff]
    %v460 = vld [vmem:[#allocation8 + $0x428] sm:$0xff]
    %v461 = vld [vmem:[#allocation8 + $0x430] sm:$0xff]
    %v462 = vld [vmem:[#allocation8 + $0x438] sm:$0xff]
    %v463 = vld [vmem:[#allocation8 + $0x440] sm:$0xff]
    %v464 = vld [vmem:[#allocation8 + $0x448] sm:$0xff]
    %v465 = vld [vmem:[#allocation8 + $0x450] sm:$0xff]
    %v466 = vld [vmem:[#allocation8 + $0x458] sm:$0xff]
    %v467 = vld [vmem:[#allocation8 + $0x460] sm:$0xff]
    %v468 = vld [vmem:[#allocation8 + $0x468] sm:$0xff]
    %v469 = vld [vmem:[#allocation8 + $0x470] sm:$0xff]
    %v470 = vld [vmem:[#allocation8 + $0x478] sm:$0xff]
    %v471 = vld [vmem:[#allocation8 + $0x480] sm:$0xff]
    %v472 = vld [vmem:[#allocation8 + $0x488] sm:$0xff]
    %v473 = vld [vmem:[#allocation8 + $0x490] sm:$0xff]
    %v474 = vld [vmem:[#allocation8 + $0x498] sm:$0xff]
    %v475 = vld [vmem:[#allocation8 + $0x4a0] sm:$0xff]
    %v476 = vld [vmem:[#allocation8 + $0x4a8] sm:$0xff]
    %v477 = vld [vmem:[#allocation8 + $0x4b0] sm:$0xff]
    %v478 = vld [vmem:[#allocation8 + $0x4b8] sm:$0xff]
    %v479 = vld [vmem:[#allocation8 + $0x4c0] sm:$0xff]
    %v480 = vld [vmem:[#allocation8 + $0x4c8] sm:$0xff]
    %v481 = vld [vmem:[#allocation8 + $0x4d0] sm:$0xff]
    %v482 = vld [vmem:[#allocation8 + $0x4d8] sm:$0xff]
    %v483 = vld [vmem:[#allocation8 + $0x4e0] sm:$0xff]
    %v484 = vld [vmem:[#allocation8 + $0x4e8] sm:$0xff]
    %v485 = vld [vmem:[#allocation8 + $0x4f0] sm:$0xff]
    %v486 = vld [vmem:[#allocation8 + $0x4f8] sm:$0xff]
    %v487 = vld [vmem:[#allocation8 + $0x500] sm:$0xff]
    %v488 = vld [vmem:[#allocation8 + $0x508] sm:$0xff]
    %v489 = vld [vmem:[#allocation8 + $0x510] sm:$0xff]
    %v490 = vld [vmem:[#allocation8 + $0x518] sm:$0xff]
    %v491 = vld [vmem:[#allocation8 + $0x520] sm:$0xff]
    %v492 = vld [vmem:[#allocation8 + $0x528] sm:$0xff]
    %v493 = vld [vmem:[#allocation8 + $0x530] sm:$0xff]
    %v494 = vld [vmem:[#allocation8 + $0x538] sm:$0xff]
    %v495 = vld [vmem:[#allocation8 + $0x540] sm:$0xff]
    %v496 = vld [vmem:[#allocation8 + $0x548] sm:$0xff]
    %v497 = vld [vmem:[#allocation8 + $0x550] sm:$0xff]
    %v498 = vld [vmem:[#allocation8 + $0x558] sm:$0xff]
    %v499 = vld [vmem:[#allocation8 + $0x560] sm:$0xff]
    %v500 = vld [vmem:[#allocation8 + $0x568] sm:$0xff]
    %v501 = vld [vmem:[#allocation8 + $0x570] sm:$0xff]
    %v502 = vld [vmem:[#allocation8 + $0x578] sm:$0xff]
    %v503 = vld [vmem:[#allocation8 + $0x580] sm:$0xff]
    %v504 = vld [vmem:[#allocation8 + $0x588] sm:$0xff]
    %v505 = vld [vmem:[#allocation8 + $0x590] sm:$0xff]
    %v506 = vld [vmem:[#allocation8 + $0x598] sm:$0xff]
    %v507 = vld [vmem:[#allocation8 + $0x5a0] sm:$0xff]
    %v508 = vld [vmem:[#allocation8 + $0x5a8] sm:$0xff]
    %v509 = vld [vmem:[#allocation8 + $0x5b0] sm:$0xff]
    %v510 = vld [vmem:[#allocation8 + $0x5b8] sm:$0xff]
    %v511 = vld [vmem:[#allocation8 + $0x5c0] sm:$0xff]
    %v512 = vld [vmem:[#allocation8 + $0x5c8] sm:$0xff]
    %v513 = vld [vmem:[#allocation8 + $0x5d0] sm:$0xff]
    %v514 = vld [vmem:[#allocation8 + $0x5d8] sm:$0xff]
    %v515 = vld [vmem:[#allocation8 + $0x5e0] sm:$0xff]
    %v516 = vld [vmem:[#allocation8 + $0x5e8] sm:$0xff]
    %v517 = vld [vmem:[#allocation8 + $0x5f0] sm:$0xff]
    %v518 = vld [vmem:[#allocation8 + $0x5f8] sm:$0xff]
    %v519 = vld [vmem:[%s4] sm:$0x7]
    %v521 = vlaneseq
    %v522 = vshrl.u32 %v521, 7
    %v523 = vsub.s32 0, %v522
    %v524 = vrot.slane %v519, %v523
    %v525 = vlaneseq
    %v526 = vshrl.u32 %v525, 7
    %v527 = vsub.s32 1, %v526
    %v528 = vrot.slane %v519, %v527
    %v529 = vlaneseq
    %v530 = vshrl.u32 %v529, 7
    %v531 = vsub.s32 2, %v530
    %v532 = vrot.slane %v519, %v531
    %536 = vmatprep.subr.mxu0 %v373
    %537 = vmatpush1.msra.mxu0 %v372
    %538 = vmatprep.subr.mxu0 %v370
    %539 = vmatpush1.msra.mxu0 %v369
    %540 = vmatprep.subr.mxu0 %v367
    %541 = vmatpush1.msra.mxu0 %v366
    %542 = vmatprep.subr.mxu0 %v364
    %543 = vmatpush1.msra.mxu0 %v363
    %544 = vmatprep.subr.mxu0 %v361
    %545 = vmatpush1.msra.mxu0 %v360
    %546 = vmatprep.subr.mxu0 %v358
    %547 = vmatpush1.msra.mxu0 %v357
    %548 = vmatprep.subr.mxu0 %v355
    %549 = vmatpush1.msra.mxu0 %v354
    %550 = vmatprep.subr.mxu0 %v352
    %551 = vmatpush1.msra.mxu0 %v351
    %552 = vmatprep.subr.mxu0 %v349
    %553 = vmatpush1.msra.mxu0 %v348
    %554 = vmatprep.subr.mxu0 %v346
    %555 = vmatpush1.msra.mxu0 %v345
    %556 = vmatprep.subr.mxu0 %v343
    %557 = vmatpush1.msra.mxu0 %v342
    %558 = vmatprep.subr.mxu0 %v340
    %559 = vmatpush1.msra.mxu0 %v339
    %560 = vmatprep.subr.mxu0 %v337
    %561 = vmatpush1.msra.mxu0 %v336
    %562 = vmatprep.subr.mxu0 %v334
    %563 = vmatpush1.msra.mxu0 %v333
    %564 = vmatprep.subr.mxu0 %v331
    %565 = vmatpush1.msra.mxu0 %v330
    %566 = vmatprep.subr.mxu0 %v328
    %567 = vmatpush1.msra.mxu0 %v327
    %568 = vmatprep.subr.mxu0 %v421
    %569 = vmatpush2.msra.mxu0 %v420
    %570 = vmatprep.subr.mxu0 %v418
    %571 = vmatpush2.msra.mxu0 %v417
    %572 = vmatprep.subr.mxu0 %v415
    %573 = vmatpush2.msra.mxu0 %v414
    %574 = vmatprep.subr.mxu0 %v412
    %575 = vmatpush2.msra.mxu0 %v411
    %576 = vmatprep.subr.mxu0 %v409
    %577 = vmatpush2.msra.mxu0 %v408
    %578 = vmatprep.subr.mxu0 %v406
    %579 = vmatpush2.msra.mxu0 %v405
    %580 = vmatprep.subr.mxu0 %v403
    %581 = vmatpush2.msra.mxu0 %v402
    %582 = vmatprep.subr.mxu0 %v400
    %583 = vmatpush2.msra.mxu0 %v399
    %584 = vmatprep.subr.mxu0 %v397
    %585 = vmatpush2.msra.mxu0 %v396
    %586 = vmatprep.subr.mxu0 %v394
    %587 = vmatpush2.msra.mxu0 %v393
    %588 = vmatprep.subr.mxu0 %v391
    %589 = vmatpush2.msra.mxu0 %v390
    %590 = vmatprep.subr.mxu0 %v388
    %591 = vmatpush2.msra.mxu0 %v387
    %592 = vmatprep.subr.mxu0 %v385
    %593 = vmatpush2.msra.mxu0 %v384
    %594 = vmatprep.subr.mxu0 %v382
    %595 = vmatpush2.msra.mxu0 %v381
    %596 = vmatprep.subr.mxu0 %v379
    %597 = vmatpush2.msra.mxu0 %v378
    %598 = vmatprep.subr.mxu0 %v376
    %599 = vmatpush2.msra.mxu0 %v375
    %600 = vmatprep.mubr.f32.mxu0 %v324
    %601 = vmatmul.mubr.f32.gmra.mxu0 %v323
    %v602 = vpop.f32.mrf.mxu0
    %v603 = vadd.f32 %v524, %v602
    %v604 = vpop.f32.mrf.mxu0
    %v605 = vadd.f32 %v528, %v604
    %606 = vdwg.mxu0
    %607 = vmatprep.subr.mxu0 %v469
    %608 = vmatpush1.msra.mxu0 %v468
    %609 = vmatprep.subr.mxu0 %v466
    %610 = vmatpush1.msra.mxu0 %v465
    %611 = vmatprep.subr.mxu0 %v463
    %612 = vmatpush1.msra.mxu0 %v462
    %613 = vmatprep.subr.mxu0 %v460
    %614 = vmatpush1.msra.mxu0 %v459
    %615 = vmatprep.subr.mxu0 %v457
    %616 = vmatpush1.msra.mxu0 %v456
    %617 = vmatprep.subr.mxu0 %v454
    %618 = vmatpush1.msra.mxu0 %v453
    %619 = vmatprep.subr.mxu0 %v451
    %620 = vmatpush1.msra.mxu0 %v450
    %621 = vmatprep.subr.mxu0 %v448
    %622 = vmatpush1.msra.mxu0 %v447
    %623 = vmatprep.subr.mxu0 %v445
    %624 = vmatpush1.msra.mxu0 %v444
    %625 = vmatprep.subr.mxu0 %v442
    %626 = vmatpush1.msra.mxu0 %v441
    %627 = vmatprep.subr.mxu0 %v439
    %628 = vmatpush1.msra.mxu0 %v438
    %629 = vmatprep.subr.mxu0 %v436
    %630 = vmatpush1.msra.mxu0 %v435
    %631 = vmatprep.subr.mxu0 %v433
    %632 = vmatpush1.msra.mxu0 %v432
    %633 = vmatprep.subr.mxu0 %v430
    %634 = vmatpush1.msra.mxu0 %v429
    %635 = vmatprep.subr.mxu0 %v427
    %636 = vmatpush1.msra.mxu0 %v426
    %637 = vmatprep.subr.mxu0 %v424
    %638 = vmatpush1.msra.mxu0 %v423
    %639 = vmatprep.subr.mxu0 %v517
    %640 = vmatpush2.msra.mxu0 %v516
    %641 = vmatprep.subr.mxu0 %v514
    %642 = vmatpush2.msra.mxu0 %v513
    %643 = vmatprep.subr.mxu0 %v511
    %644 = vmatpush2.msra.mxu0 %v510
    %645 = vmatprep.subr.mxu0 %v508
    %646 = vmatpush2.msra.mxu0 %v507
    %647 = vmatprep.subr.mxu0 %v505
    %648 = vmatpush2.msra.mxu0 %v504
    %649 = vmatprep.subr.mxu0 %v502
    %650 = vmatpush2.msra.mxu0 %v501
    %651 = vmatprep.subr.mxu0 %v499
    %652 = vmatpush2.msra.mxu0 %v498
    %653 = vmatprep.subr.mxu0 %v496
    %654 = vmatpush2.msra.mxu0 %v495
    %655 = vmatprep.subr.mxu0 %v493
    %656 = vmatpush2.msra.mxu0 %v492
    %657 = vmatprep.subr.mxu0 %v490
    %658 = vmatpush2.msra.mxu0 %v489
    %659 = vmatprep.subr.mxu0 %v487
    %660 = vmatpush2.msra.mxu0 %v486
    %661 = vmatprep.subr.mxu0 %v484
    %662 = vmatpush2.msra.mxu0 %v483
    %663 = vmatprep.subr.mxu0 %v481
    %664 = vmatpush2.msra.mxu0 %v480
    %665 = vmatprep.subr.mxu0 %v478
    %666 = vmatpush2.msra.mxu0 %v477
    %667 = vmatprep.subr.mxu0 %v475
    %668 = vmatpush2.msra.mxu0 %v474
    %669 = vmatprep.subr.mxu0 %v472
    %670 = vmatpush2.msra.mxu0 %v471
    %671 = vmatprep.mubr.f32.mxu0 %v326
    %672 = vmatmul.mubr.f32.gmra.mxu0 %v325
    %v673 = vpop.f32.mrf.mxu0
    %v674 = vadd.f32 %v603, %v673
    %v675 = vpop.f32.mrf.mxu0
    %v676 = vadd.f32 %v605, %v675
    %677 = vdwg.mxu0
    %678 = vmatprep.subr.mxu0 0.0
    %679 = vmatpush1.msra.mxu0 %v374
    %680 = vmatprep.subr.mxu0 0.0
    %681 = vmatpush1.msra.mxu0 %v371
    %682 = vmatprep.subr.mxu0 0.0
    %683 = vmatpush1.msra.mxu0 %v368
    %684 = vmatprep.subr.mxu0 0.0
    %685 = vmatpush1.msra.mxu0 %v365
    %686 = vmatprep.subr.mxu0 0.0
    %687 = vmatpush1.msra.mxu0 %v362
    %688 = vmatprep.subr.mxu0 0.0
    %689 = vmatpush1.msra.mxu0 %v359
    %690 = vmatprep.subr.mxu0 0.0
    %691 = vmatpush1.msra.mxu0 %v356
    %692 = vmatprep.subr.mxu0 0.0
    %693 = vmatpush1.msra.mxu0 %v353
    %694 = vmatprep.subr.mxu0 0.0
    %695 = vmatpush1.msra.mxu0 %v350
    %696 = vmatprep.subr.mxu0 0.0
    %697 = vmatpush1.msra.mxu0 %v347
    %698 = vmatprep.subr.mxu0 0.0
    %699 = vmatpush1.msra.mxu0 %v344
    %700 = vmatprep.subr.mxu0 0.0
    %701 = vmatpush1.msra.mxu0 %v341
    %702 = vmatprep.subr.mxu0 0.0
    %703 = vmatpush1.msra.mxu0 %v338
    %704 = vmatprep.subr.mxu0 0.0
    %705 = vmatpush1.msra.mxu0 %v335
    %706 = vmatprep.subr.mxu0 0.0
    %707 = vmatpush1.msra.mxu0 %v332
    %708 = vmatprep.subr.mxu0 0.0
    %709 = vmatpush1.msra.mxu0 %v329
    %710 = vmatprep.subr.mxu0 0.0
    %711 = vmatpush2.msra.mxu0 %v422
    %712 = vmatprep.subr.mxu0 0.0
    %713 = vmatpush2.msra.mxu0 %v419
    %714 = vmatprep.subr.mxu0 0.0
    %715 = vmatpush2.msra.mxu0 %v416
    %716 = vmatprep.subr.mxu0 0.0
    %717 = vmatpush2.msra.mxu0 %v413
    %718 = vmatprep.subr.mxu0 0.0
    %719 = vmatpush2.msra.mxu0 %v410
    %720 = vmatprep.subr.mxu0 0.0
    %721 = vmatpush2.msra.mxu0 %v407
    %722 = vmatprep.subr.mxu0 0.0
    %723 = vmatpush2.msra.mxu0 %v404
    %724 = vmatprep.subr.mxu0 0.0
    %725 = vmatpush2.msra.mxu0 %v401
    %726 = vmatprep.subr.mxu0 0.0
    %727 = vmatpush2.msra.mxu0 %v398
    %728 = vmatprep.subr.mxu0 0.0
    %729 = vmatpush2.msra.mxu0 %v395
    %730 = vmatprep.subr.mxu0 0.0
    %731 = vmatpush2.msra.mxu0 %v392
    %732 = vmatprep.subr.mxu0 0.0
    %733 = vmatpush2.msra.mxu0 %v389
    %734 = vmatprep.subr.mxu0 0.0
    %735 = vmatpush2.msra.mxu0 %v386
    %736 = vmatprep.subr.mxu0 0.0
    %737 = vmatpush2.msra.mxu0 %v383
    %738 = vmatprep.subr.mxu0 0.0
    %739 = vmatpush2.msra.mxu0 %v380
    %740 = vmatprep.subr.mxu0 0.0
    %741 = vmatpush2.msra.mxu0 %v377
    %742 = vmatprep.mubr.f32.mxu0 %v324
    %743 = vmatmul.mubr.f32.gmra.mxu0 %v323
    %v744 = vpop.f32.mrf.mxu0
    %v745 = vadd.f32 %v532, %v744
    %v746 = vpop.f32.mrf.mxu0
    %747 = vdwg.mxu0
    %748 = vmatprep.subr.mxu0 0.0
    %749 = vmatpush1.msra.mxu0 %v470
    %750 = vmatprep.subr.mxu0 0.0
    %751 = vmatpush1.msra.mxu0 %v467
    %752 = vmatprep.subr.mxu0 0.0
    %753 = vmatpush1.msra.mxu0 %v464
    %754 = vmatprep.subr.mxu0 0.0
    %755 = vmatpush1.msra.mxu0 %v461
    %756 = vmatprep.subr.mxu0 0.0
    %757 = vmatpush1.msra.mxu0 %v458
    %758 = vmatprep.subr.mxu0 0.0
    %759 = vmatpush1.msra.mxu0 %v455
    %760 = vmatprep.subr.mxu0 0.0
    %761 = vmatpush1.msra.mxu0 %v452
    %762 = vmatprep.subr.mxu0 0.0
    %763 = vmatpush1.msra.mxu0 %v449
    %764 = vmatprep.subr.mxu0 0.0
    %765 = vmatpush1.msra.mxu0 %v446
    %766 = vmatprep.subr.mxu0 0.0
    %767 = vmatpush1.msra.mxu0 %v443
    %768 = vmatprep.subr.mxu0 0.0
    %769 = vmatpush1.msra.mxu0 %v440
    %770 = vmatprep.subr.mxu0 0.0
    %771 = vmatpush1.msra.mxu0 %v437
    %772 = vmatprep.subr.mxu0 0.0
    %773 = vmatpush1.msra.mxu0 %v434
    %774 = vmatprep.subr.mxu0 0.0
    %775 = vmatpush1.msra.mxu0 %v431
    %776 = vmatprep.subr.mxu0 0.0
    %777 = vmatpush1.msra.mxu0 %v428
    %778 = vmatprep.subr.mxu0 0.0
    %779 = vmatpush1.msra.mxu0 %v425
    %780 = vmatprep.subr.mxu0 0.0
    %781 = vmatpush2.msra.mxu0 %v518
    %782 = vmatprep.subr.mxu0 0.0
    %783 = vmatpush2.msra.mxu0 %v515
    %784 = vmatprep.subr.mxu0 0.0
    %785 = vmatpush2.msra.mxu0 %v512
    %786 = vmatprep.subr.mxu0 0.0
    %787 = vmatpush2.msra.mxu0 %v509
    %788 = vmatprep.subr.mxu0 0.0
    %789 = vmatpush2.msra.mxu0 %v506
    %790 = vmatprep.subr.mxu0 0.0
    %791 = vmatpush2.msra.mxu0 %v503
    %792 = vmatprep.subr.mxu0 0.0
    %793 = vmatpush2.msra.mxu0 %v500
    %794 = vmatprep.subr.mxu0 0.0
    %795 = vmatpush2.msra.mxu0 %v497
    %796 = vmatprep.subr.mxu0 0.0
    %797 = vmatpush2.msra.mxu0 %v494
    %798 = vmatprep.subr.mxu0 0.0
    %799 = vmatpush2.msra.mxu0 %v491
    %800 = vmatprep.subr.mxu0 0.0
    %801 = vmatpush2.msra.mxu0 %v488
    %802 = vmatprep.subr.mxu0 0.0
    %803 = vmatpush2.msra.mxu0 %v485
    %804 = vmatprep.subr.mxu0 0.0
    %805 = vmatpush2.msra.mxu0 %v482
    %806 = vmatprep.subr.mxu0 0.0
    %807 = vmatpush2.msra.mxu0 %v479
    %808 = vmatprep.subr.mxu0 0.0
    %809 = vmatpush2.msra.mxu0 %v476
    %810 = vmatprep.subr.mxu0 0.0
    %811 = vmatpush2.msra.mxu0 %v473
    %812 = vmatprep.mubr.f32.mxu0 %v326
    %813 = vmatmul.mubr.f32.gmra.mxu0 %v325
    %v814 = vpop.f32.mrf.mxu0
    %v815 = vadd.f32 %v745, %v814
    %v816 = vpop.f32.mrf.mxu0
    %817 = vdwg.mxu0
    %v818 = vmax.f32 %v674, 0.0
    %v819 = vmax.f32 %v676, 0.0
    %v820 = vmax.f32 %v815, 0.0
    %v821 = vld [vmem:[#allocation10] sm:$0xff]
    %v822 = vld [vmem:[#allocation10 + $0x8] sm:$0xff]
    %v823 = vld [vmem:[#allocation10 + $0x10] sm:$0xff]
    %v824 = vld [vmem:[#allocation10 + $0x18] sm:$0xff]
    %v825 = vld [vmem:[#allocation10 + $0x20] sm:$0xff]
    %v826 = vld [vmem:[#allocation10 + $0x28] sm:$0xff]
    %v827 = vld [vmem:[#allocation10 + $0x30] sm:$0xff]
    %v828 = vld [vmem:[#allocation10 + $0x38] sm:$0xff]
    %v829 = vld [vmem:[#allocation10 + $0x40] sm:$0xff]
    %v830 = vld [vmem:[#allocation10 + $0x48] sm:$0xff]
    %v831 = vld [vmem:[#allocation10 + $0x50] sm:$0xff]
    %v832 = vld [vmem:[#allocation10 + $0x58] sm:$0xff]
    %v833 = vld [vmem:[#allocation10 + $0x60] sm:$0xff]
    %v834 = vld [vmem:[#allocation10 + $0x68] sm:$0xff]
    %v835 = vld [vmem:[#allocation10 + $0x70] sm:$0xff]
    %v836 = vld [vmem:[#allocation10 + $0x78] sm:$0xff]
    %v837 = vld [vmem:[#allocation10 + $0x80] sm:$0xff]
    %v838 = vld [vmem:[#allocation10 + $0x88] sm:$0xff]
    %v839 = vld [vmem:[#allocation10 + $0x90] sm:$0xff]
    %v840 = vld [vmem:[#allocation10 + $0x98] sm:$0xff]
    %v841 = vld [vmem:[#allocation10 + $0xa0] sm:$0xff]
    %v842 = vld [vmem:[#allocation10 + $0xa8] sm:$0xff]
    %v843 = vld [vmem:[#allocation10 + $0xb0] sm:$0xff]
    %v844 = vld [vmem:[#allocation10 + $0xb8] sm:$0xff]
    %v845 = vld [vmem:[#allocation10 + $0xc0] sm:$0xff]
    %v846 = vld [vmem:[#allocation10 + $0xc8] sm:$0xff]
    %v847 = vld [vmem:[#allocation10 + $0xd0] sm:$0xff]
    %v848 = vld [vmem:[#allocation10 + $0xd8] sm:$0xff]
    %v849 = vld [vmem:[#allocation10 + $0xe0] sm:$0xff]
    %v850 = vld [vmem:[#allocation10 + $0xe8] sm:$0xff]
    %v851 = vld [vmem:[#allocation10 + $0xf0] sm:$0xff]
    %v852 = vld [vmem:[#allocation10 + $0xf8] sm:$0xff]
    %v853 = vld [vmem:[#allocation10 + $0x100] sm:$0xff]
    %v854 = vld [vmem:[#allocation10 + $0x108] sm:$0xff]
    %v855 = vld [vmem:[#allocation10 + $0x110] sm:$0xff]
    %v856 = vld [vmem:[#allocation10 + $0x118] sm:$0xff]
    %v857 = vld [vmem:[#allocation10 + $0x120] sm:$0xff]
    %v858 = vld [vmem:[#allocation10 + $0x128] sm:$0xff]
    %v859 = vld [vmem:[#allocation10 + $0x130] sm:$0xff]
    %v860 = vld [vmem:[#allocation10 + $0x138] sm:$0xff]
    %v861 = vld [vmem:[#allocation10 + $0x140] sm:$0xff]
    %v862 = vld [vmem:[#allocation10 + $0x148] sm:$0xff]
    %v863 = vld [vmem:[#allocation10 + $0x150] sm:$0xff]
    %v864 = vld [vmem:[#allocation10 + $0x158] sm:$0xff]
    %v865 = vld [vmem:[#allocation10 + $0x160] sm:$0xff]
    %v866 = vld [vmem:[#allocation10 + $0x168] sm:$0xff]
    %v867 = vld [vmem:[#allocation10 + $0x170] sm:$0xff]
    %v868 = vld [vmem:[#allocation10 + $0x178] sm:$0xff]
    %v869 = vld [vmem:[%s6] sm:$0x1]
    %v871 = vlaneseq
    %v872 = vshrl.u32 %v871, 7
    %v873 = vsub.s32 0, %v872
    %v874 = vrot.slane %v869, %v873
    %876 = vmatprep.subr.mxu0 0.0
    %877 = vmatpush1.msra.mxu0 %v836
    %878 = vmatprep.subr.mxu0 0.0
    %879 = vmatpush1.msra.mxu0 %v835
    %880 = vmatprep.subr.mxu0 0.0
    %881 = vmatpush1.msra.mxu0 %v834
    %882 = vmatprep.subr.mxu0 0.0
    %883 = vmatpush1.msra.mxu0 %v833
    %884 = vmatprep.subr.mxu0 0.0
    %885 = vmatpush1.msra.mxu0 %v832
    %886 = vmatprep.subr.mxu0 0.0
    %887 = vmatpush1.msra.mxu0 %v831
    %888 = vmatprep.subr.mxu0 0.0
    %889 = vmatpush1.msra.mxu0 %v830
    %890 = vmatprep.subr.mxu0 0.0
    %891 = vmatpush1.msra.mxu0 %v829
    %892 = vmatprep.subr.mxu0 0.0
    %893 = vmatpush1.msra.mxu0 %v828
    %894 = vmatprep.subr.mxu0 0.0
    %895 = vmatpush1.msra.mxu0 %v827
    %896 = vmatprep.subr.mxu0 0.0
    %897 = vmatpush1.msra.mxu0 %v826
    %898 = vmatprep.subr.mxu0 0.0
    %899 = vmatpush1.msra.mxu0 %v825
    %900 = vmatprep.subr.mxu0 0.0
    %901 = vmatpush1.msra.mxu0 %v824
    %902 = vmatprep.subr.mxu0 0.0
    %903 = vmatpush1.msra.mxu0 %v823
    %904 = vmatprep.subr.mxu0 0.0
    %905 = vmatpush1.msra.mxu0 %v822
    %906 = vmatprep.subr.mxu0 0.0
    %907 = vmatpush1.msra.mxu0 %v821
    %908 = vmatprep.subr.mxu0 0.0
    %909 = vmatpush2.msra.mxu0 %v852
    %910 = vmatprep.subr.mxu0 0.0
    %911 = vmatpush2.msra.mxu0 %v851
    %912 = vmatprep.subr.mxu0 0.0
    %913 = vmatpush2.msra.mxu0 %v850
    %914 = vmatprep.subr.mxu0 0.0
    %915 = vmatpush2.msra.mxu0 %v849
    %916 = vmatprep.subr.mxu0 0.0
    %917 = vmatpush2.msra.mxu0 %v848
    %918 = vmatprep.subr.mxu0 0.0
    %919 = vmatpush2.msra.mxu0 %v847
    %920 = vmatprep.subr.mxu0 0.0
    %921 = vmatpush2.msra.mxu0 %v846
    %922 = vmatprep.subr.mxu0 0.0
    %923 = vmatpush2.msra.mxu0 %v845
    %924 = vmatprep.subr.mxu0 0.0
    %925 = vmatpush2.msra.mxu0 %v844
    %926 = vmatprep.subr.mxu0 0.0
    %927 = vmatpush2.msra.mxu0 %v843
    %928 = vmatprep.subr.mxu0 0.0
    %929 = vmatpush2.msra.mxu0 %v842
    %930 = vmatprep.subr.mxu0 0.0
    %931 = vmatpush2.msra.mxu0 %v841
    %932 = vmatprep.subr.mxu0 0.0
    %933 = vmatpush2.msra.mxu0 %v840
    %934 = vmatprep.subr.mxu0 0.0
    %935 = vmatpush2.msra.mxu0 %v839
    %936 = vmatprep.subr.mxu0 0.0
    %937 = vmatpush2.msra.mxu0 %v838
    %938 = vmatprep.subr.mxu0 0.0
    %939 = vmatpush2.msra.mxu0 %v837
    %940 = vmatprep.mubr.f32.mxu0 %v819
    %941 = vmatmul.mubr.f32.gmra.mxu0 %v818
    %v942 = vpop.f32.mrf.mxu0
    %v943 = vadd.f32 %v874, %v942
    %v944 = vpop.f32.mrf.mxu0
    %945 = vdwg.mxu0
    %946 = vmatprep.subr.mxu0 0.0
    %947 = vmatpush1.msra.mxu0 %v868
    %948 = vmatprep.subr.mxu0 0.0
    %949 = vmatpush1.msra.mxu0 %v867
    %950 = vmatprep.subr.mxu0 0.0
    %951 = vmatpush1.msra.mxu0 %v866
    %952 = vmatprep.subr.mxu0 0.0
    %953 = vmatpush1.msra.mxu0 %v865
    %954 = vmatprep.subr.mxu0 0.0
    %955 = vmatpush1.msra.mxu0 %v864
    %956 = vmatprep.subr.mxu0 0.0
    %957 = vmatpush1.msra.mxu0 %v863
    %958 = vmatprep.subr.mxu0 0.0
    %959 = vmatpush1.msra.mxu0 %v862
    %960 = vmatprep.subr.mxu0 0.0
    %961 = vmatpush1.msra.mxu0 %v861
    %962 = vmatprep.subr.mxu0 0.0
    %963 = vmatpush1.msra.mxu0 %v860
    %964 = vmatprep.subr.mxu0 0.0
    %965 = vmatpush1.msra.mxu0 %v859
    %966 = vmatprep.subr.mxu0 0.0
    %967 = vmatpush1.msra.mxu0 %v858
    %968 = vmatprep.subr.mxu0 0.0
    %969 = vmatpush1.msra.mxu0 %v857
    %970 = vmatprep.subr.mxu0 0.0
    %971 = vmatpush1.msra.mxu0 %v856
    %972 = vmatprep.subr.mxu0 0.0
    %973 = vmatpush1.msra.mxu0 %v855
    %974 = vmatprep.subr.mxu0 0.0
    %975 = vmatpush1.msra.mxu0 %v854
    %976 = vmatprep.subr.mxu0 0.0
    %977 = vmatpush1.msra.mxu0 %v853
    %978 = vmatprep.subr.mxu0 0.0
    %979 = vmatpush2.msra.mxu0 0.0
    %980 = vmatprep.subr.mxu0 0.0
    %981 = vmatpush2.msra.mxu0 0.0
    %982 = vmatprep.subr.mxu0 0.0
    %983 = vmatpush2.msra.mxu0 0.0
    %984 = vmatprep.subr.mxu0 0.0
    %985 = vmatpush2.msra.mxu0 0.0
    %986 = vmatprep.subr.mxu0 0.0
    %987 = vmatpush2.msra.mxu0 0.0
    %988 = vmatprep.subr.mxu0 0.0
    %989 = vmatpush2.msra.mxu0 0.0
    %990 = vmatprep.subr.mxu0 0.0
    %991 = vmatpush2.msra.mxu0 0.0
    %992 = vmatprep.subr.mxu0 0.0
    %993 = vmatpush2.msra.mxu0 0.0
    %994 = vmatprep.subr.mxu0 0.0
    %995 = vmatpush2.msra.mxu0 0.0
    %996 = vmatprep.subr.mxu0 0.0
    %997 = vmatpush2.msra.mxu0 0.0
    %998 = vmatprep.subr.mxu0 0.0
    %999 = vmatpush2.msra.mxu0 0.0
    %1000 = vmatprep.subr.mxu0 0.0
    %1001 = vmatpush2.msra.mxu0 0.0
    %1002 = vmatprep.subr.mxu0 0.0
    %1003 = vmatpush2.msra.mxu0 0.0
    %1004 = vmatprep.subr.mxu0 0.0
    %1005 = vmatpush2.msra.mxu0 0.0
    %1006 = vmatprep.subr.mxu0 0.0
    %1007 = vmatpush2.msra.mxu0 0.0
    %1008 = vmatprep.subr.mxu0 0.0
    %1009 = vmatpush2.msra.mxu0 0.0
    %1010 = vmatprep.mubr.f32.mxu0 0.0
    %1011 = vmatmul.mubr.f32.gmra.mxu0 %v820
    %v1012 = vpop.f32.mrf.mxu0
    %v1013 = vadd.f32 %v943, %v1012
    %v1014 = vpop.f32.mrf.mxu0
    %1015 = vdwg.mxu0
    %v1016 = vtanh.pop %v1013
    %v1017 = vld [vmem:[%s7] sm:$0x1]
    %v1019 = vlaneseq
    %v1020 = vshrl.u32 %v1019, 7
    %v1021 = vsub.s32 0, %v1020
    %v1022 = vrot.slane %v1017, %v1021
    %v1024 = vmul.f32 %v1016, %v1022
    %1025 = vst [vmem:[#allocation11] sm:$0xff] %v1024
    // Predicated region
    $region54: #{tpu_custom_call.1} parent=1 // pred_check
      _
    $region55: #{tpu_custom_call.1} parent=1 // pred_check_branch
      %1027 = sbr.rel (0) target = $region57
    $region56: #{tpu_custom_call.1} parent=1 // pred_region
      %s1029 = ssub.s32 128, 128
      %1030 = vsyncadd [#allocation4], %s1029
      %s1032 = sshll.u32 [#allocation11], 4
      %s1033 = int_to_ptr.vmem [resolvable:$true] %s1032
      %1035 = dma.vmem_to_hbm [thread:$0]  %s1033, 128, %s8, [#allocation4]
    $region57: #{tpu_custom_call.1} parent=1 // pred_fallthru
      _
    // Predicated region
    $region58: #{tpu_custom_call.1} parent=1 // pred_check
      _
    $region59: #{tpu_custom_call.1} parent=1 // pred_check_branch
      %1037 = sbr.rel (0) target = $region61
    $region60: #{tpu_custom_call.1} parent=1 // pred_region
      %1038 = dma.done [#allocation4], 128
    $region61: #{tpu_custom_call.1} parent=1 // pred_fallthru
      _
    %1039 = vsyncpa [#allocation3], 1
    %1040 = vsyncpa [#allocation6], 1
    %1041 = vsyncpa [#allocation9], 1
    %1042 = vsyncpa [#allocation4], 1

</llo_original>
